<compile_context>
chip_gen: v7x
topology: tpu7x:2x2x1
jax: 0.10.0
libtpu: 0.0.40
codegen_flags: <defaults>
</compile_context>

<pallas_src>
from functools import partial

import jax
import jax.numpy as jnp
from jax.experimental import pallas as pl
from jax.experimental.pallas import tpu as pltpu


# ----------------------------- Pallas kernel ------------------------------- #
def ast_t_stem_head_kernel(patches_ref, wconv_ref, wcls_ref, out_ref):
    # patches_ref : (tile_n*P, Kp) bf16 im2col patches for tile_n samples
    #               (column K is 1.0 -> folded conv/BN bias)
    # wconv_ref   : (Kp, Cp)  bf16 stem weight; row K = [bconv, 1.0, 0...]
    # wcls_ref    : (Cp, NCp) f32 classifier weight; row Cstem = bcls
    # out_ref     : (tile_n, NCp) f32 logits (lane-dense, padded classes)
    tile_n = out_ref.shape[0]
    P = patches_ref.shape[0] // tile_n

    # Conv stem (3x3/s2, folded BN) as one MXU matmul, f32 accumulate.
    conv = jnp.dot(patches_ref[...], wconv_ref[...],
                   preferred_element_type=jnp.float32)        # (tile_n*P, Cp)
    conv = jnp.clip(conv, 0.0, 6.0)                           # ReLU6 on f32
    # (the 1.0 "bias channel" at column Cstem survives ReLU6 unchanged)

    # Per-sample global average pool: reshape + mean over the patch axis.
    feat = jnp.mean(conv.reshape(tile_n, P, conv.shape[-1]), axis=1)  # (tile_n, Cp)

    # nn.Dropout(0.2) in eval mode is the identity -> skip.
    # Classifier; bcls is picked up by the 1.0 channel of feat.
    out_ref[...] = jnp.dot(feat, wcls_ref[...],
                           preferred_element_type=jnp.float32)        # (tile_n, NCp)


# ------------------------------- glue (JAX) -------------------------------- #
def im2col_3x3_s2_p1(x_nhwc):
    """im2col for a 3x3 / stride 2 / pad 1 conv.  Returns (N, Ho*Wo, 9*C)."""
    N, H, W, C = x_nhwc.shape
    k, stride, pad = 3, 2, 1
    xp = jnp.pad(x_nhwc, ((0, 0), (pad, pad), (pad, pad), (0, 0)))
    Ho = (H + 2 * pad - k) // stride + 1
    Wo = (W + 2 * pad - k) // stride + 1
    cols = []
    for di in range(k):
        for dj in range(k):
            cols.append(xp[:, di:di + stride * Ho:stride,
                           dj:dj + stride * Wo:stride, :])
    patches = jnp.stack(cols, axis=-2)            # (N, Ho, Wo, 9, C)
    return patches.reshape(N, Ho * Wo, k * k * C), Ho, Wo


def _round_up(x, m):
    return (x + m - 1) // m * m


def _pick_tile_n(n, p, target_rows=1024):
    """Largest divisor of n with tile_n * p <= target_rows (>=1)."""
    t = max(1, min(n, target_rows // max(p, 1)))
    while n % t:
        t -= 1
    return t


@partial(jax.jit, static_argnames=("num_segments", "tile_n", "compute_dtype"))
def ast_t_backbone_pred(input_nchw, params, *, num_segments, tile_n=None,
                        compute_dtype=jnp.bfloat16):
    """AST_T.forward(backbone_pred=True, glancer=True) — fused Pallas call."""
    B, TC, H, W = input_nchw.shape
    T, C = num_segments, 3
    assert TC == T * C
    N = B * T

    # (B, T*3, H, W) -> (B*T, 3, H, W) -> NHWC -> im2col patches (all fused by jit)
    x = input_nchw.reshape(N, C, H, W).transpose(0, 2, 3, 1)
    patches, _, _ = im2col_3x3_s2_p1(x)           # (N, P, K)
    _, P, K = patches.shape
    Cstem = params["wconv"].shape[1]
    nc = params["wcls"].shape[1]

    # --- layout padding / bias folding (zeros & 1.0 lanes are inert) ---
    Kp = _round_up(K + 1, 8)                       # 27 (+1 bias col) -> 32
    Cp = _round_up(max(Cstem + 1, 128), 128)       # lane-dense stem channels
    NCp = _round_up(max(nc, 128), 128)             # lane-dense output classes

    pf = patches.reshape(N * P, K)
    pf = jnp.concatenate(
        [pf, jnp.ones((N * P, 1), pf.dtype),       # bias column (-> bconv row)
         jnp.zeros((N * P, Kp - K - 1), pf.dtype)], axis=1)
    pf = pf.astype(compute_dtype)                  # dominant HBM stream in bf16

    wconv_p = jnp.zeros((Kp, Cp), jnp.float32)
    wconv_p = wconv_p.at[:K, :Cstem].set(params["wconv"])
    wconv_p = wconv_p.at[K, :Cstem].set(params["bconv"].reshape(-1))  # folded bias
    wconv_p = wconv_p.at[K, Cstem].set(1.0)        # drives the bcls "ones channel"
    wconv_p = wconv_p.astype(compute_dtype)

    wcls_p = jnp.zeros((Cp, NCp), jnp.float32)     # tiny -> keep f32
    wcls_p = wcls_p.at[:Cstem, :nc].set(params["wcls"])
    wcls_p = wcls_p.at[Cstem, :nc].set(params["bcls"].reshape(-1))    # folded bcls

    if tile_n is None:
        tile_n = _pick_tile_n(N, P)                # ~1K patch rows / step
    assert N % tile_n == 0 and (tile_n % 8 == 0 or tile_n == N)
    grid = (N // tile_n,)

    out = pl.pallas_call(
        ast_t_stem_head_kernel,
        out_shape=jax.ShapeDtypeStruct((N, NCp), jnp.float32),
        grid=grid,
        in_specs=[
            # per-step patch tile (double-buffered DMA overlaps the matmul)
            pl.BlockSpec((tile_n * P, Kp), lambda i: (i, 0)),
            # weights: same block every step -> stay resident, DMA'd once
            pl.BlockSpec((Kp, Cp), lambda i: (0, 0)),
            pl.BlockSpec((Cp, NCp), lambda i: (0, 0)),
        ],
        out_specs=pl.BlockSpec((tile_n, NCp), lambda i: (i, 0)),
        compiler_params=pltpu.CompilerParams(
            # steps are independent -> megacore-shardable on v7x
            dimension_semantics=("parallel",)),
    )(pf, wconv_p, wcls_p)

    logits = out[:, :nc]                          # drop padded class columns
    return logits.reshape(B, T, nc)               # pred.view(_b, _t, -1)


def reference_jnp(input_nchw, num_segments, params):
    B, TC, H, W = input_nchw.shape
    T = num_segments
    x = input_nchw.reshape(B * T, 3, H, W).transpose(0, 2, 3, 1)
    patches, _, _ = im2col_3x3_s2_p1(x)
    conv = jnp.clip(patches @ params["wconv"] + params["bconv"], 0.0, 6.0)
    feat = conv.mean(axis=1)
    logits = feat @ params["wcls"] + params["bcls"]
    return logits.reshape(B, T, -1)


# --------------------------------- main ------------------------------------ #
if __name__ == "__main__":
    # Small shapes consistent with the module: B=2 clips, T=8 segments,
    # 3 channels per frame, 16x16 spatial, 8 classes, 32 stem channels.
    B, T, H, W = 2, 8, 16, 16
    num_classes = 8
    Cstem = 32
    K = 3 * 3 * 3

    key = jax.random.PRNGKey(0)
    k_in, k_wc, k_bc, k_wl, k_bl = jax.random.split(key, 5)

    input_nchw = jax.random.normal(k_in, (B, T * 3, H, W), dtype=jnp.float32)

    params = {
        # conv stem weight laid out as (KH*KW*Cin, Cout) to match im2col order
        "wconv": 0.1 * jax.random.normal(k_wc, (K, Cstem), dtype=jnp.float32),
        "bconv": 0.1 * jax.random.normal(k_bc, (Cstem,), dtype=jnp.float32),
        # nn.Linear(num_ftrs, num_classes): stored transposed as (Cin, Cout)
        "wcls": 0.1 * jax.random.normal(k_wl, (Cstem, num_classes),
                                        dtype=jnp.float32),
        "bcls": 0.1 * jax.random.normal(k_bl, (num_classes,), dtype=jnp.float32),
    }

    # tile_n=8 -> N=16 samples, grid=(2,): exercises the multi-step pipelined grid.
    pred = ast_t_backbone_pred(input_nchw, params, num_segments=T, tile_n=8)
    pred = jax.block_until_ready(pred)

    ref = reference_jnp(input_nchw, T, params)
    assert pred.shape == (B, T, num_classes)
    # bf16 patch/weight stream with f32 accumulation vs. pure-f32 reference.
    assert jnp.allclose(pred, ref, atol=2e-2, rtol=2e-2), float(
        jnp.max(jnp.abs(pred - ref)))

    print("KERNEL_OK")
</pallas_src>

<mosaic_0001>
module attributes {stable_mosaic.version = 11 : i64} {
  func.func @ast_t_stem_head_kernel(%arg0: i32, %arg1: memref<512x32xbf16, #tpu.memory_space<vmem>>, %arg2: memref<32x128xbf16, #tpu.memory_space<vmem>>, %arg3: memref<128x128xf32, #tpu.memory_space<vmem>>, %arg4: memref<8x128xf32, #tpu.memory_space<vmem>>) attributes {dimension_semantics = [#tpu.dimension_semantics<parallel>], iteration_bounds = array<i64: 2>, scalar_prefetch = 0 : i64, scratch_operands = 0 : i64, tpu.core_type = #tpu.core_type<tc>, window_params = [{transform_indices = @transform_0, window_bounds = array<i64: 512, 32>}, {pipeline_mode = #tpu.pipeline_mode<synchronous>, transform_indices = @transform_1, window_bounds = array<i64: 32, 128>}, {pipeline_mode = #tpu.pipeline_mode<synchronous>, transform_indices = @transform_2, window_bounds = array<i64: 128, 128>}, {transform_indices = @transform_3, window_bounds = array<i64: 8, 128>}]} {
    %c0 = arith.constant 0 : index
    %c0_0 = arith.constant 0 : index
    %0 = vector.load %arg1[%c0, %c0_0] : memref<512x32xbf16, #tpu.memory_space<vmem>>, vector<512x32xbf16>
    %c0_1 = arith.constant 0 : index
    %c0_2 = arith.constant 0 : index
    %1 = vector.load %arg2[%c0_1, %c0_2] : memref<32x128xbf16, #tpu.memory_space<vmem>>, vector<32x128xbf16>
    %cst = arith.constant dense<0.000000e+00> : vector<512x128xf32>
    %2 = tpu.matmul %0, %1, %cst {dimension_numbers = #tpu.dot_dimension_numbers<[1], [0], [0], [1], [0, 0, 1, 1], [], []>} : vector<512x32xbf16>, vector<32x128xbf16>, vector<512x128xf32> -> vector<512x128xf32>
    %cst_3 = arith.constant 0.000000e+00 : f32
    %cst_4 = arith.constant 6.000000e+00 : f32
    %3 = vector.broadcast %cst_3 : f32 to vector<512x128xf32>
    %4 = arith.maximumf %3, %2 : vector<512x128xf32>
    %5 = vector.broadcast %cst_4 : f32 to vector<512x128xf32>
    %6 = arith.minimumf %5, %4 : vector<512x128xf32>
    %7 = vector.shape_cast %6 : vector<512x128xf32> to vector<8x64x128xf32>
    %cst_5 = arith.constant dense<0.000000e+00> : vector<8x128xf32>
    %8 = vector.multi_reduction <add>, %7, %cst_5 [1] : vector<8x64x128xf32> to vector<8x128xf32>
    %cst_6 = arith.constant 6.400000e+01 : f32
    %9 = vector.broadcast %cst_6 : f32 to vector<8x128xf32>
    %10 = arith.divf %8, %9 : vector<8x128xf32>
    %c0_7 = arith.constant 0 : index
    %c0_8 = arith.constant 0 : index
    %11 = vector.load %arg3[%c0_7, %c0_8] : memref<128x128xf32, #tpu.memory_space<vmem>>, vector<128x128xf32>
    %cst_9 = arith.constant dense<0.000000e+00> : vector<8x128xf32>
    %12 = tpu.matmul %10, %11, %cst_9 {dimension_numbers = #tpu.dot_dimension_numbers<[1], [0], [0], [1], [0, 0, 1, 1], [], []>} : vector<8x128xf32>, vector<128x128xf32>, vector<8x128xf32> -> vector<8x128xf32>
    %c0_10 = arith.constant 0 : index
    %c0_11 = arith.constant 0 : index
    %13 = vector.load %arg4[%c0_10, %c0_11] : memref<8x128xf32, #tpu.memory_space<vmem>>, vector<8x128xf32>
    tpu.vector_store %arg4[%c0_10, %c0_11], %12 {strides = array<i32>} : memref<8x128xf32, #tpu.memory_space<vmem>>, vector<8x128xf32>,
    return
  }
  func.func @transform_0(%arg0: i32) -> (i32, i32) {
    %c0_i32 = arith.constant 0 : i32
    %c0_i32_0 = arith.constant 0 : i32
    return %arg0, %c0_i32 : i32, i32
  }
  func.func @transform_1(%arg0: i32) -> (i32, i32) {
    %c0_i32 = arith.constant 0 : i32
    %c0_i32_0 = arith.constant 0 : i32
    %c0_i32_1 = arith.constant 0 : i32
    return %c0_i32, %c0_i32_0 : i32, i32
  }
  func.func @transform_2(%arg0: i32) -> (i32, i32) {
    %c0_i32 = arith.constant 0 : i32
    %c0_i32_0 = arith.constant 0 : i32
    %c0_i32_1 = arith.constant 0 : i32
    return %c0_i32, %c0_i32_0 : i32, i32
  }
  func.func @transform_3(%arg0: i32) -> (i32, i32) {
    %c0_i32 = arith.constant 0 : i32
    %c0_i32_0 = arith.constant 0 : i32
    return %arg0, %c0_i32 : i32, i32
  }
}

</mosaic_0001>

<llo_original>
// kernel: ast_t_backbone_pred.1
$region0: #{ast_t_backbone_pred.1}
  #allocation0 [shape = 'u32[]', space=smem, size = 0x4, offset = 0x4, fixed_abs, tag = 'smem constant byte address 0x4 - core index']
  #allocation1 [shape = 'u32[144,128]{1,0:T(1,128)}', space=vmem, size = 0x12000, scoped, tag = 'internal scratch']
  %s0 = inlined_call_operand.vmem [shape: bf16[1024,32], index: 0, kind: input, shape index: {}]
  %s1 = inlined_call_operand.vmem [shape: bf16[32,128], index: 1, kind: input, shape index: {}]
  %s2 = inlined_call_operand.vmem [shape: f32[128,128], index: 2, kind: input, shape index: {}]
  %s3 = inlined_call_operand.vmem [shape: f32[16,128], index: 3, kind: output, shape index: {}]
  %s4 = sld [smem:[#allocation0]]
  $region45: #{ast_t_backbone_pred.1} parent=0
    _
  %s6 = ssub.s32 1, %s4
  %s7 = scalar_select 0, %s6, %s4
  loop: start=0, step=1, limit=4
  $region2: #{ast_t_backbone_pred.1} parent=0 // loop_pre_header
    _
  $region3: #{ast_t_backbone_pred.1} parent=0 // loop_header
    %s9 = sphi 0, %s13
    %p10 = scmp.ge.s32.totalorder %s9, 4
    %s19 = sphi 0, %s21
    %s22 = sphi 0, %s19
    %s23 = sphi 0, %s22
    %s39 = sphi 0, %s23
    %s43 = sphi 0, %s43
    %s45 = sphi 0, %s43
    %s46 = sphi 0, %s45
    %s60 = sphi 0, %s46
    %s64 = sphi 0, %s64
    %s66 = sphi 0, %s64
    %s67 = sphi 0, %s66
    %s81 = sphi 0, %s67
    %s87 = sphi 0, %s89
    %s90 = sphi 0, %s87
    %s91 = sphi 0, %s90
    %s107 = sphi 0, %s91
  $region4: #{ast_t_backbone_pred.1} parent=0 // loop_header_branch
    %12 = sbr.rel (%p10) target = $region8
  $region5: #{ast_t_backbone_pred.1} parent=0 // loop_body
    %s14 = ssub.s32 %s9, 1
    %s15 = ssub.s32 %s9, 2
    %s16 = sadd.s32 %s9, 1
    %s17 = ssub.s32 %s9, %s16
    %p18 = scmp.eq.s32.totalorder %s17, 0
    %s20 = sadd.s32 %s19, 1
    %s21 = scalar_select %p18, %s19, %s20
    %p24 = pneg %p18
    %p25 = scmp.eq.s32.totalorder %s9, 1
    %p26 = por %p24, %p25
    %p27 = scmp.ne.s32.totalorder %s19, %s22
    %p28 = scmp.eq.s32.totalorder %s9, 0
    %p29 = por %p27, %p28
    %p30 = scmp.ne.s32.totalorder %s19, %s22
    %p31 = scmp.eq.s32.totalorder %s14, 1
    %p32 = por %p30, %p31
    %p33 = scmp.ne.s32.totalorder %s22, %s23
    %p34 = scmp.eq.s32.totalorder %s14, 0
    %p35 = por %p33, %p34
    %p36 = scmp.ne.s32.totalorder %s22, %s23
    %p37 = scmp.eq.s32.totalorder %s15, 1
    %p38 = por %p36, %p37
    %p40 = scmp.ne.s32.totalorder %s23, %s39
    %p41 = scmp.eq.s32.totalorder %s15, 0
    %p42 = por %p40, %p41
    %s44 = sadd.s32 %s43, 1
    %p47 = scmp.eq.s32.totalorder %s9, 1
    %p48 = scmp.ne.s32.totalorder %s43, %s45
    %p49 = scmp.eq.s32.totalorder %s9, 0
    %p50 = por %p48, %p49
    %p51 = scmp.ne.s32.totalorder %s43, %s45
    %p52 = scmp.eq.s32.totalorder %s14, 1
    %p53 = por %p51, %p52
    %p54 = scmp.ne.s32.totalorder %s45, %s46
    %p55 = scmp.eq.s32.totalorder %s14, 0
    %p56 = por %p54, %p55
    %p57 = scmp.ne.s32.totalorder %s45, %s46
    %p58 = scmp.eq.s32.totalorder %s15, 1
    %p59 = por %p57, %p58
    %p61 = scmp.ne.s32.totalorder %s46, %s60
    %p62 = scmp.eq.s32.totalorder %s15, 0
    %p63 = por %p61, %p62
    %s65 = sadd.s32 %s64, 1
    %p68 = scmp.eq.s32.totalorder %s9, 1
    %p69 = scmp.ne.s32.totalorder %s64, %s66
    %p70 = scmp.eq.s32.totalorder %s9, 0
    %p71 = por %p69, %p70
    %p72 = scmp.ne.s32.totalorder %s64, %s66
    %p73 = scmp.eq.s32.totalorder %s14, 1
    %p74 = por %p72, %p73
    %p75 = scmp.ne.s32.totalorder %s66, %s67
    %p76 = scmp.eq.s32.totalorder %s14, 0
    %p77 = por %p75, %p76
    %p78 = scmp.ne.s32.totalorder %s66, %s67
    %p79 = scmp.eq.s32.totalorder %s15, 1
    %p80 = por %p78, %p79
    %p82 = scmp.ne.s32.totalorder %s67, %s81
    %p83 = scmp.eq.s32.totalorder %s15, 0
    %p84 = por %p82, %p83
    %s85 = ssub.s32 %s9, %s16
    %p86 = scmp.eq.s32.totalorder %s85, 0
    %s88 = sadd.s32 %s87, 1
    %s89 = scalar_select %p86, %s87, %s88
    %p92 = pneg %p86
    %p93 = scmp.eq.s32.totalorder %s9, 1
    %p94 = por %p92, %p93
    %p95 = scmp.ne.s32.totalorder %s87, %s90
    %p96 = scmp.eq.s32.totalorder %s9, 0
    %p97 = por %p95, %p96
    %p98 = scmp.ne.s32.totalorder %s87, %s90
    %p99 = scmp.eq.s32.totalorder %s14, 1
    %p100 = por %p98, %p99
    %p101 = scmp.ne.s32.totalorder %s90, %s91
    %p102 = scmp.eq.s32.totalorder %s14, 0
    %p103 = por %p101, %p102
    %p104 = scmp.ne.s32.totalorder %s90, %s91
    %p105 = scmp.eq.s32.totalorder %s15, 1
    %p106 = por %p104, %p105
    %p108 = scmp.ne.s32.totalorder %s91, %s107
    %p109 = scmp.eq.s32.totalorder %s15, 0
    %p110 = por %p108, %p109
    %p111 = scmp.le.s32.totalorder 1, %s9
    %p112 = scmp.lt.s32.totalorder %s9, 3
    %p113 = pnand %p111, %p112
    %p114 = pneg %p113
    // Predicated region
    $region9: #{ast_t_backbone_pred.1} parent=5 // pred_check
      _
    $region10: #{ast_t_backbone_pred.1} parent=5 // pred_check_branch
      %116 = sbr.rel (%p113) target = $region12
    $region11: #{ast_t_backbone_pred.1} parent=5 // pred_region
      %s117 = ssub.s32 %s9, 1
      // Predicated region
      $region13: #{ast_t_backbone_pred.1} parent=11 // pred_check
        %p118 = pneg %p56
      $region14: #{ast_t_backbone_pred.1} parent=11 // pred_check_branch
        %120 = sbr.rel (%p118) target = $region16
      $region15: #{ast_t_backbone_pred.1} parent=11 // pred_region
        _
      $region16: #{ast_t_backbone_pred.1} parent=11 // pred_fallthru
        _
      // Predicated region
      $region17: #{ast_t_backbone_pred.1} parent=11 // pred_check
        %p121 = pneg %p77
      $region18: #{ast_t_backbone_pred.1} parent=11 // pred_check_branch
        %123 = sbr.rel (%p121) target = $region20
      $region19: #{ast_t_backbone_pred.1} parent=11 // pred_region
        _
      $region20: #{ast_t_backbone_pred.1} parent=11 // pred_fallthru
        _
    $region12: #{ast_t_backbone_pred.1} parent=5 // pred_fallthru
      _
    %p124 = scmp.lt.s32.totalorder %s9, 2
    // Predicated region
    $region21: #{ast_t_backbone_pred.1} parent=5 // pred_check
      %p125 = pneg %p124
    $region22: #{ast_t_backbone_pred.1} parent=5 // pred_check_branch
      %127 = sbr.rel (%p125) target = $region24
    $region23: #{ast_t_backbone_pred.1} parent=5 // pred_region
      // Predicated region
      $region25: #{ast_t_backbone_pred.1} parent=23 // pred_check
        %p128 = pneg %p29
      $region26: #{ast_t_backbone_pred.1} parent=23 // pred_check_branch
        %130 = sbr.rel (%p128) target = $region28
      $region27: #{ast_t_backbone_pred.1} parent=23 // pred_region
        %s131 = smul.u32 64, %s9
        %p132 = scmp.lt.s32.totalorder %s131, 127
        %s133 = scalar_select %p132, %s131, 127
        %s134 = smul.addr %s133, 4
        %s135 = scalar_lea.vmem %s0, %s134
        %s136 = smul.u32 64, %s9
      $region28: #{ast_t_backbone_pred.1} parent=23 // pred_fallthru
        _
    $region24: #{ast_t_backbone_pred.1} parent=5 // pred_fallthru
      _
    %p137 = scmp.le.s32.totalorder 1, %s9
    %p138 = scmp.lt.s32.totalorder %s9, 3
    %p139 = pnand %p137, %p138
    %p140 = pneg %p139
    // Predicated region
    $region29: #{ast_t_backbone_pred.1} parent=5 // pred_check
      _
    $region30: #{ast_t_backbone_pred.1} parent=5 // pred_check_branch
      %142 = sbr.rel (%p139) target = $region32
    $region31: #{ast_t_backbone_pred.1} parent=5 // pred_region
      %s143 = ssub.s32 %s9, 1
      %s144 = smul.u32 64, %s14
      %p145 = scmp.lt.s32.totalorder %s144, 127
      %s146 = scalar_select %p145, %s144, 127
      %s147 = smul.addr %s146, 4
      %s148 = scalar_lea.vmem %s0, %s147
      %p149 = pneg %p35
      %p150 = pneg %p32
      %p151 = pneg %p56
      %p152 = pneg %p53
      %p153 = pneg %p77
      %p154 = pneg %p74
      %p155 = pneg %p103
      %p156 = pneg %p100
      %p157 = scmp.lt.s32.totalorder %s14, 1
      %s158 = scalar_select %p157, %s14, 1
      %s159 = smul.addr %s158, 8
      %s160 = scalar_lea.vmem %s3, %s159
      %s161 = smul.u32 64, %s14
      %p162 = scmp.lt.s32.totalorder %s161, 127
      %s163 = scalar_select %p162, %s161, 127
      %s164 = smul.addr %s163, 4
      %s165 = scalar_lea.vmem %s0, %s164
      %s166 = smul.u32 64, %s14
      %p167 = scmp.lt.s32.totalorder %s14, 1
      %s168 = scalar_select %p167, %s14, 1
      %s169 = smul.addr %s168, 8
      %s170 = scalar_lea.vmem %s3, %s169
      %v172 = vld [vmem:[%s165] sm:$0xf]
      %v173 = vld [vmem:[%s165 + $0x4] sm:$0xf]
      %v174 = vld [vmem:[%s165 + $0x8] sm:$0xf]
      %v175 = vld [vmem:[%s165 + $0xc] sm:$0xf]
      %v176 = vld [vmem:[%s165 + $0x10] sm:$0xf]
      %v177 = vld [vmem:[%s165 + $0x14] sm:$0xf]
      %v178 = vld [vmem:[%s165 + $0x18] sm:$0xf]
      %v179 = vld [vmem:[%s165 + $0x1c] sm:$0xf]
      %v180 = vld [vmem:[%s165 + $0x20] sm:$0xf]
      %v181 = vld [vmem:[%s165 + $0x24] sm:$0xf]
      %v182 = vld [vmem:[%s165 + $0x28] sm:$0xf]
      %v183 = vld [vmem:[%s165 + $0x2c] sm:$0xf]
      %v184 = vld [vmem:[%s165 + $0x30] sm:$0xf]
      %v185 = vld [vmem:[%s165 + $0x34] sm:$0xf]
      %v186 = vld [vmem:[%s165 + $0x38] sm:$0xf]
      %v187 = vld [vmem:[%s165 + $0x3c] sm:$0xf]
      %v188 = vld [vmem:[%s165 + $0x40] sm:$0xf]
      %v189 = vld [vmem:[%s165 + $0x44] sm:$0xf]
      %v190 = vld [vmem:[%s165 + $0x48] sm:$0xf]
      %v191 = vld [vmem:[%s165 + $0x4c] sm:$0xf]
      %v192 = vld [vmem:[%s165 + $0x50] sm:$0xf]
      %v193 = vld [vmem:[%s165 + $0x54] sm:$0xf]
      %v194 = vld [vmem:[%s165 + $0x58] sm:$0xf]
      %v195 = vld [vmem:[%s165 + $0x5c] sm:$0xf]
      %v196 = vld [vmem:[%s165 + $0x60] sm:$0xf]
      %v197 = vld [vmem:[%s165 + $0x64] sm:$0xf]
      %v198 = vld [vmem:[%s165 + $0x68] sm:$0xf]
      %v199 = vld [vmem:[%s165 + $0x6c] sm:$0xf]
      %v200 = vld [vmem:[%s165 + $0x70] sm:$0xf]
      %v201 = vld [vmem:[%s165 + $0x74] sm:$0xf]
      %v202 = vld [vmem:[%s165 + $0x78] sm:$0xf]
      %v203 = vld [vmem:[%s165 + $0x7c] sm:$0xf]
      %v204 = vld [vmem:[%s165 + $0x80] sm:$0xf]
      %v205 = vld [vmem:[%s165 + $0x84] sm:$0xf]
      %v206 = vld [vmem:[%s165 + $0x88] sm:$0xf]
      %v207 = vld [vmem:[%s165 + $0x8c] sm:$0xf]
      %v208 = vld [vmem:[%s165 + $0x90] sm:$0xf]
      %v209 = vld [vmem:[%s165 + $0x94] sm:$0xf]
      %v210 = vld [vmem:[%s165 + $0x98] sm:$0xf]
      %v211 = vld [vmem:[%s165 + $0x9c] sm:$0xf]
      %v212 = vld [vmem:[%s165 + $0xa0] sm:$0xf]
      %v213 = vld [vmem:[%s165 + $0xa4] sm:$0xf]
      %v214 = vld [vmem:[%s165 + $0xa8] sm:$0xf]
      %v215 = vld [vmem:[%s165 + $0xac] sm:$0xf]
      %v216 = vld [vmem:[%s165 + $0xb0] sm:$0xf]
      %v217 = vld [vmem:[%s165 + $0xb4] sm:$0xf]
      %v218 = vld [vmem:[%s165 + $0xb8] sm:$0xf]
      %v219 = vld [vmem:[%s165 + $0xbc] sm:$0xf]
      %v220 = vld [vmem:[%s165 + $0xc0] sm:$0xf]
      %v221 = vld [vmem:[%s165 + $0xc4] sm:$0xf]
      %v222 = vld [vmem:[%s165 + $0xc8] sm:$0xf]
      %v223 = vld [vmem:[%s165 + $0xcc] sm:$0xf]
      %v224 = vld [vmem:[%s165 + $0xd0] sm:$0xf]
      %v225 = vld [vmem:[%s165 + $0xd4] sm:$0xf]
      %v226 = vld [vmem:[%s165 + $0xd8] sm:$0xf]
      %v227 = vld [vmem:[%s165 + $0xdc] sm:$0xf]
      %v228 = vld [vmem:[%s165 + $0xe0] sm:$0xf]
      %v229 = vld [vmem:[%s165 + $0xe4] sm:$0xf]
      %v230 = vld [vmem:[%s165 + $0xe8] sm:$0xf]
      %v231 = vld [vmem:[%s165 + $0xec] sm:$0xf]
      %v232 = vld [vmem:[%s165 + $0xf0] sm:$0xf]
      %v233 = vld [vmem:[%s165 + $0xf4] sm:$0xf]
      %v234 = vld [vmem:[%s165 + $0xf8] sm:$0xf]
      %v235 = vld [vmem:[%s165 + $0xfc] sm:$0xf]
      %v236 = vld [vmem:[%s1] sm:$0xf]
      %v237 = vld [vmem:[%s1 + $0x4] sm:$0xf]
      %v238 = vld [vmem:[%s1 + $0x8] sm:$0xf]
      %v239 = vld [vmem:[%s1 + $0xc] sm:$0xf]
      %v304 = vunpack.c.l.b16 %v172
      %v305 = vunpack.c.l.b16 %v173
      %v306 = vunpack.c.l.b16 %v174
      %v307 = vunpack.c.l.b16 %v175
      %v308 = vunpack.c.l.b16 %v176
      %v309 = vunpack.c.l.b16 %v177
      %v310 = vunpack.c.l.b16 %v178
      %v311 = vunpack.c.l.b16 %v179
      %v312 = vunpack.c.l.b16 %v180
      %v313 = vunpack.c.l.b16 %v181
      %v314 = vunpack.c.l.b16 %v182
      %v315 = vunpack.c.l.b16 %v183
      %v316 = vunpack.c.l.b16 %v184
      %v317 = vunpack.c.l.b16 %v185
      %v318 = vunpack.c.l.b16 %v186
      %v319 = vunpack.c.l.b16 %v187
      %v320 = vunpack.c.l.b16 %v188
      %v321 = vunpack.c.l.b16 %v189
      %v322 = vunpack.c.l.b16 %v190
      %v323 = vunpack.c.l.b16 %v191
      %v324 = vunpack.c.l.b16 %v192
      %v325 = vunpack.c.l.b16 %v193
      %v326 = vunpack.c.l.b16 %v194
      %v327 = vunpack.c.l.b16 %v195
      %v328 = vunpack.c.l.b16 %v196
      %v329 = vunpack.c.l.b16 %v197
      %v330 = vunpack.c.l.b16 %v198
      %v331 = vunpack.c.l.b16 %v199
      %v332 = vunpack.c.l.b16 %v200
      %v333 = vunpack.c.l.b16 %v201
      %v334 = vunpack.c.l.b16 %v202
      %v335 = vunpack.c.l.b16 %v203
      %v336 = vunpack.c.l.b16 %v204
      %v337 = vunpack.c.l.b16 %v205
      %v338 = vunpack.c.l.b16 %v206
      %v339 = vunpack.c.l.b16 %v207
      %v340 = vunpack.c.l.b16 %v208
      %v341 = vunpack.c.l.b16 %v209
      %v342 = vunpack.c.l.b16 %v210
      %v343 = vunpack.c.l.b16 %v211
      %v344 = vunpack.c.l.b16 %v212
      %v345 = vunpack.c.l.b16 %v213
      %v346 = vunpack.c.l.b16 %v214
      %v347 = vunpack.c.l.b16 %v215
      %v348 = vunpack.c.l.b16 %v216
      %v349 = vunpack.c.l.b16 %v217
      %v350 = vunpack.c.l.b16 %v218
      %v351 = vunpack.c.l.b16 %v219
      %v352 = vunpack.c.l.b16 %v220
      %v353 = vunpack.c.l.b16 %v221
      %v354 = vunpack.c.l.b16 %v222
      %v355 = vunpack.c.l.b16 %v223
      %v356 = vunpack.c.l.b16 %v224
      %v357 = vunpack.c.l.b16 %v225
      %v358 = vunpack.c.l.b16 %v226
      %v359 = vunpack.c.l.b16 %v227
      %v360 = vunpack.c.l.b16 %v228
      %v361 = vunpack.c.l.b16 %v229
      %v362 = vunpack.c.l.b16 %v230
      %v363 = vunpack.c.l.b16 %v231
      %v364 = vunpack.c.l.b16 %v232
      %v365 = vunpack.c.l.b16 %v233
      %v366 = vunpack.c.l.b16 %v234
      %v367 = vunpack.c.l.b16 %v235
      %v368 = vpack.c.b16 %v305, %v304
      %v369 = vpack.c.b16 %v307, %v306
      %v370 = vpack.c.b16 %v309, %v308
      %v371 = vpack.c.b16 %v311, %v310
      %v372 = vpack.c.b16 %v313, %v312
      %v373 = vpack.c.b16 %v315, %v314
      %v374 = vpack.c.b16 %v317, %v316
      %v375 = vpack.c.b16 %v319, %v318
      %v376 = vpack.c.b16 %v321, %v320
      %v377 = vpack.c.b16 %v323, %v322
      %v378 = vpack.c.b16 %v325, %v324
      %v379 = vpack.c.b16 %v327, %v326
      %v380 = vpack.c.b16 %v329, %v328
      %v381 = vpack.c.b16 %v331, %v330
      %v382 = vpack.c.b16 %v333, %v332
      %v383 = vpack.c.b16 %v335, %v334
      %v384 = vpack.c.b16 %v337, %v336
      %v385 = vpack.c.b16 %v339, %v338
      %v386 = vpack.c.b16 %v341, %v340
      %v387 = vpack.c.b16 %v343, %v342
      %v388 = vpack.c.b16 %v345, %v344
      %v389 = vpack.c.b16 %v347, %v346
      %v390 = vpack.c.b16 %v349, %v348
      %v391 = vpack.c.b16 %v351, %v350
      %v392 = vpack.c.b16 %v353, %v352
      %v393 = vpack.c.b16 %v355, %v354
      %v394 = vpack.c.b16 %v357, %v356
      %v395 = vpack.c.b16 %v359, %v358
      %v396 = vpack.c.b16 %v361, %v360
      %v397 = vpack.c.b16 %v363, %v362
      %v398 = vpack.c.b16 %v365, %v364
      %v399 = vpack.c.b16 %v367, %v366
      %v404 = vunpack.c.l.b16 %v236
      %v405 = vunpack.c.l.b16 %v237
      %v406 = vunpack.c.l.b16 %v238
      %v407 = vunpack.c.l.b16 %v239
      %v408 = vpack.c.b16 %v405, %v404
      %v409 = vpack.c.b16 %v407, %v406
      %vm412 = vcmask 261120
      %v414 = vsel %vm412, %v368, 0
      %v417 = vsel %vm412, %v369, 0
      %v420 = vsel %vm412, %v370, 0
      %v423 = vsel %vm412, %v371, 0
      %v426 = vsel %vm412, %v372, 0
      %v429 = vsel %vm412, %v373, 0
      %v432 = vsel %vm412, %v374, 0
      %v435 = vsel %vm412, %v375, 0
      %v438 = vsel %vm412, %v376, 0
      %v441 = vsel %vm412, %v377, 0
      %v444 = vsel %vm412, %v378, 0
      %v447 = vsel %vm412, %v379, 0
      %v450 = vsel %vm412, %v380, 0
      %v453 = vsel %vm412, %v381, 0
      %v456 = vsel %vm412, %v382, 0
      %v459 = vsel %vm412, %v383, 0
      %v462 = vsel %vm412, %v384, 0
      %v465 = vsel %vm412, %v385, 0
      %v468 = vsel %vm412, %v386, 0
      %v471 = vsel %vm412, %v387, 0
      %v474 = vsel %vm412, %v388, 0
      %v477 = vsel %vm412, %v389, 0
      %v480 = vsel %vm412, %v390, 0
      %v483 = vsel %vm412, %v391, 0
      %v486 = vsel %vm412, %v392, 0
      %v489 = vsel %vm412, %v393, 0
      %v492 = vsel %vm412, %v394, 0
      %v495 = vsel %vm412, %v395, 0
      %v498 = vsel %vm412, %v396, 0
      %v501 = vsel %vm412, %v397, 0
      %v504 = vsel %vm412, %v398, 0
      %v507 = vsel %vm412, %v399, 0
      %509 = vmatprep.subr.bf16.mxu0 0
      %510 = vmatpush1.bf16.msra.mxu0 %v408
      %511 = vmatprep.subr.bf16.mxu0 0
      %512 = vmatpush1.bf16.msra.mxu0 %v409
      %513 = vmatprep.subr.bf16.mxu0 0
      %514 = vmatpush1.bf16.msra.mxu0 0
      %515 = vmatprep.subr.bf16.mxu0 0
      %516 = vmatpush1.bf16.msra.mxu0 0
      %517 = vmatprep.subr.bf16.mxu0 0
      %518 = vmatpush1.bf16.msra.mxu0 0
      %519 = vmatprep.subr.bf16.mxu0 0
      %520 = vmatpush1.bf16.msra.mxu0 0
      %521 = vmatprep.subr.bf16.mxu0 0
      %522 = vmatpush1.bf16.msra.mxu0 0
      %523 = vmatprep.subr.bf16.mxu0 0
      %524 = vmatpush1.bf16.msra.mxu0 0
      %525 = vmatprep.subr.bf16.mxu0 0
      %526 = vmatpush1.bf16.msra.mxu0 0
      %527 = vmatprep.subr.bf16.mxu0 0
      %528 = vmatpush1.bf16.msra.mxu0 0
      %529 = vmatprep.subr.bf16.mxu0 0
      %530 = vmatpush1.bf16.msra.mxu0 0
      %531 = vmatprep.subr.bf16.mxu0 0
      %532 = vmatpush1.bf16.msra.mxu0 0
      %533 = vmatprep.subr.bf16.mxu0 0
      %534 = vmatpush1.bf16.msra.mxu0 0
      %535 = vmatprep.subr.bf16.mxu0 0
      %536 = vmatpush1.bf16.msra.mxu0 0
      %537 = vmatprep.subr.bf16.mxu0 0
      %538 = vmatpush1.bf16.msra.mxu0 0
      %539 = vmatprep.subr.bf16.mxu0 0
      %540 = vmatpush1.bf16.msra.mxu0 0
      %541 = vmatprep.mubr.bf16.mxu0 0
      %542 = vmatmul.mubr.bf16.gmra.mrb[0].mxu0 %v414
      %v543 = vpop.f32.mrb[0].mxu0
      %v544 = vadd.f32 0.0, %v543
      %v545 = vpop.f32.mrb[0].mxu0
      %v546 = vpop.f32.mrb[0].mxu0
      %v547 = vadd.f32 0.0, %v546
      %v548 = vpop.f32.mrb[0].mxu0
      %549 = vmatprep.mubr.bf16.mxu0 0
      %550 = vmatmul.mubr.bf16.gmra.mrb[0].mxu0 %v417
      %v551 = vpop.f32.mrb[0].mxu0
      %v552 = vadd.f32 0.0, %v551
      %v553 = vpop.f32.mrb[0].mxu0
      %v554 = vpop.f32.mrb[0].mxu0
      %v555 = vadd.f32 0.0, %v554
      %v556 = vpop.f32.mrb[0].mxu0
      %557 = vmatprep.mubr.bf16.mxu0 0
      %558 = vmatmul.mubr.bf16.gmra.mrb[0].mxu0 %v420
      %v559 = vpop.f32.mrb[0].mxu0
      %v560 = vadd.f32 0.0, %v559
      %v561 = vpop.f32.mrb[0].mxu0
      %v562 = vpop.f32.mrb[0].mxu0
      %v563 = vadd.f32 0.0, %v562
      %v564 = vpop.f32.mrb[0].mxu0
      %565 = vmatprep.mubr.bf16.mxu0 0
      %566 = vmatmul.mubr.bf16.gmra.mrb[0].mxu0 %v423
      %v567 = vpop.f32.mrb[0].mxu0
      %v568 = vadd.f32 0.0, %v567
      %v569 = vpop.f32.mrb[0].mxu0
      %v570 = vpop.f32.mrb[0].mxu0
      %v571 = vadd.f32 0.0, %v570
      %v572 = vpop.f32.mrb[0].mxu0
      %573 = vmatprep.mubr.bf16.mxu0 0
      %574 = vmatmul.mubr.bf16.gmra.mrb[0].mxu0 %v426
      %v575 = vpop.f32.mrb[0].mxu0
      %v576 = vadd.f32 0.0, %v575
      %v577 = vpop.f32.mrb[0].mxu0
      %v578 = vpop.f32.mrb[0].mxu0
      %v579 = vadd.f32 0.0, %v578
      %v580 = vpop.f32.mrb[0].mxu0
      %581 = vmatprep.mubr.bf16.mxu0 0
      %582 = vmatmul.mubr.bf16.gmra.mrb[0].mxu0 %v429
      %v583 = vpop.f32.mrb[0].mxu0
      %v584 = vadd.f32 0.0, %v583
      %v585 = vpop.f32.mrb[0].mxu0
      %v586 = vpop.f32.mrb[0].mxu0
      %v587 = vadd.f32 0.0, %v586
      %v588 = vpop.f32.mrb[0].mxu0
      %589 = vmatprep.mubr.bf16.mxu0 0
      %590 = vmatmul.mubr.bf16.gmra.mrb[0].mxu0 %v432
      %v591 = vpop.f32.mrb[0].mxu0
      %v592 = vadd.f32 0.0, %v591
      %v593 = vpop.f32.mrb[0].mxu0
      %v594 = vpop.f32.mrb[0].mxu0
      %v595 = vadd.f32 0.0, %v594
      %v596 = vpop.f32.mrb[0].mxu0
      %597 = vmatprep.mubr.bf16.mxu0 0
      %598 = vmatmul.mubr.bf16.gmra.mrb[0].mxu0 %v435
      %v599 = vpop.f32.mrb[0].mxu0
      %v600 = vadd.f32 0.0, %v599
      %v601 = vpop.f32.mrb[0].mxu0
      %v602 = vpop.f32.mrb[0].mxu0
      %v603 = vadd.f32 0.0, %v602
      %v604 = vpop.f32.mrb[0].mxu0
      %605 = vmatprep.mubr.bf16.mxu0 0
      %606 = vmatmul.mubr.bf16.gmra.mrb[0].mxu0 %v438
      %v607 = vpop.f32.mrb[0].mxu0
      %v608 = vadd.f32 0.0, %v607
      %v609 = vpop.f32.mrb[0].mxu0
      %v610 = vpop.f32.mrb[0].mxu0
      %v611 = vadd.f32 0.0, %v610
      %v612 = vpop.f32.mrb[0].mxu0
      %613 = vmatprep.mubr.bf16.mxu0 0
      %614 = vmatmul.mubr.bf16.gmra.mrb[0].mxu0 %v441
      %v615 = vpop.f32.mrb[0].mxu0
      %v616 = vadd.f32 0.0, %v615
      %v617 = vpop.f32.mrb[0].mxu0
      %v618 = vpop.f32.mrb[0].mxu0
      %v619 = vadd.f32 0.0, %v618
      %v620 = vpop.f32.mrb[0].mxu0
      %621 = vmatprep.mubr.bf16.mxu0 0
      %622 = vmatmul.mubr.bf16.gmra.mrb[0].mxu0 %v444
      %v623 = vpop.f32.mrb[0].mxu0
      %v624 = vadd.f32 0.0, %v623
      %v625 = vpop.f32.mrb[0].mxu0
      %v626 = vpop.f32.mrb[0].mxu0
      %v627 = vadd.f32 0.0, %v626
      %v628 = vpop.f32.mrb[0].mxu0
      %629 = vmatprep.mubr.bf16.mxu0 0
      %630 = vmatmul.mubr.bf16.gmra.mrb[0].mxu0 %v447
      %v631 = vpop.f32.mrb[0].mxu0
      %v632 = vadd.f32 0.0, %v631
      %v633 = vpop.f32.mrb[0].mxu0
      %v634 = vpop.f32.mrb[0].mxu0
      %v635 = vadd.f32 0.0, %v634
      %v636 = vpop.f32.mrb[0].mxu0
      %637 = vmatprep.mubr.bf16.mxu0 0
      %638 = vmatmul.mubr.bf16.gmra.mrb[0].mxu0 %v450
      %v639 = vpop.f32.mrb[0].mxu0
      %v640 = vadd.f32 0.0, %v639
      %v641 = vpop.f32.mrb[0].mxu0
      %v642 = vpop.f32.mrb[0].mxu0
      %v643 = vadd.f32 0.0, %v642
      %v644 = vpop.f32.mrb[0].mxu0
      %645 = vmatprep.mubr.bf16.mxu0 0
      %646 = vmatmul.mubr.bf16.gmra.mrb[0].mxu0 %v453
      %v647 = vpop.f32.mrb[0].mxu0
      %v648 = vadd.f32 0.0, %v647
      %v649 = vpop.f32.mrb[0].mxu0
      %v650 = vpop.f32.mrb[0].mxu0
      %v651 = vadd.f32 0.0, %v650
      %v652 = vpop.f32.mrb[0].mxu0
      %653 = vmatprep.mubr.bf16.mxu0 0
      %654 = vmatmul.mubr.bf16.gmra.mrb[0].mxu0 %v456
      %v655 = vpop.f32.mrb[0].mxu0
      %v656 = vadd.f32 0.0, %v655
      %v657 = vpop.f32.mrb[0].mxu0
      %v658 = vpop.f32.mrb[0].mxu0
      %v659 = vadd.f32 0.0, %v658
      %v660 = vpop.f32.mrb[0].mxu0
      %661 = vmatprep.mubr.bf16.mxu0 0
      %662 = vmatmul.mubr.bf16.gmra.mrb[0].mxu0 %v459
      %v663 = vpop.f32.mrb[0].mxu0
      %v664 = vadd.f32 0.0, %v663
      %v665 = vpop.f32.mrb[0].mxu0
      %v666 = vpop.f32.mrb[0].mxu0
      %v667 = vadd.f32 0.0, %v666
      %v668 = vpop.f32.mrb[0].mxu0
      %669 = vmatprep.mubr.bf16.mxu0 0
      %670 = vmatmul.mubr.bf16.gmra.mrb[0].mxu0 %v462
      %v671 = vpop.f32.mrb[0].mxu0
      %v672 = vadd.f32 0.0, %v671
      %v673 = vpop.f32.mrb[0].mxu0
      %v674 = vpop.f32.mrb[0].mxu0
      %v675 = vadd.f32 0.0, %v674
      %v676 = vpop.f32.mrb[0].mxu0
      %677 = vmatprep.mubr.bf16.mxu0 0
      %678 = vmatmul.mubr.bf16.gmra.mrb[0].mxu0 %v465
      %v679 = vpop.f32.mrb[0].mxu0
      %v680 = vadd.f32 0.0, %v679
      %v681 = vpop.f32.mrb[0].mxu0
      %v682 = vpop.f32.mrb[0].mxu0
      %v683 = vadd.f32 0.0, %v682
      %v684 = vpop.f32.mrb[0].mxu0
      %685 = vmatprep.mubr.bf16.mxu0 0
      %686 = vmatmul.mubr.bf16.gmra.mrb[0].mxu0 %v468
      %v687 = vpop.f32.mrb[0].mxu0
      %v688 = vadd.f32 0.0, %v687
      %v689 = vpop.f32.mrb[0].mxu0
      %v690 = vpop.f32.mrb[0].mxu0
      %v691 = vadd.f32 0.0, %v690
      %v692 = vpop.f32.mrb[0].mxu0
      %693 = vmatprep.mubr.bf16.mxu0 0
      %694 = vmatmul.mubr.bf16.gmra.mrb[0].mxu0 %v471
      %v695 = vpop.f32.mrb[0].mxu0
      %v696 = vadd.f32 0.0, %v695
      %v697 = vpop.f32.mrb[0].mxu0
      %v698 = vpop.f32.mrb[0].mxu0
      %v699 = vadd.f32 0.0, %v698
      %v700 = vpop.f32.mrb[0].mxu0
      %701 = vmatprep.mubr.bf16.mxu0 0
      %702 = vmatmul.mubr.bf16.gmra.mrb[0].mxu0 %v474
      %v703 = vpop.f32.mrb[0].mxu0
      %v704 = vadd.f32 0.0, %v703
      %v705 = vpop.f32.mrb[0].mxu0
      %v706 = vpop.f32.mrb[0].mxu0
      %v707 = vadd.f32 0.0, %v706
      %v708 = vpop.f32.mrb[0].mxu0
      %709 = vmatprep.mubr.bf16.mxu0 0
      %710 = vmatmul.mubr.bf16.gmra.mrb[0].mxu0 %v477
      %v711 = vpop.f32.mrb[0].mxu0
      %v712 = vadd.f32 0.0, %v711
      %v713 = vpop.f32.mrb[0].mxu0
      %v714 = vpop.f32.mrb[0].mxu0
      %v715 = vadd.f32 0.0, %v714
      %v716 = vpop.f32.mrb[0].mxu0
      %717 = vmatprep.mubr.bf16.mxu0 0
      %718 = vmatmul.mubr.bf16.gmra.mrb[0].mxu0 %v480
      %v719 = vpop.f32.mrb[0].mxu0
      %v720 = vadd.f32 0.0, %v719
      %v721 = vpop.f32.mrb[0].mxu0
      %v722 = vpop.f32.mrb[0].mxu0
      %v723 = vadd.f32 0.0, %v722
      %v724 = vpop.f32.mrb[0].mxu0
      %725 = vmatprep.mubr.bf16.mxu0 0
      %726 = vmatmul.mubr.bf16.gmra.mrb[0].mxu0 %v483
      %v727 = vpop.f32.mrb[0].mxu0
      %v728 = vadd.f32 0.0, %v727
      %v729 = vpop.f32.mrb[0].mxu0
      %v730 = vpop.f32.mrb[0].mxu0
      %v731 = vadd.f32 0.0, %v730
      %v732 = vpop.f32.mrb[0].mxu0
      %733 = vmatprep.mubr.bf16.mxu0 0
      %734 = vmatmul.mubr.bf16.gmra.mrb[0].mxu0 %v486
      %v735 = vpop.f32.mrb[0].mxu0
      %v736 = vadd.f32 0.0, %v735
      %v737 = vpop.f32.mrb[0].mxu0
      %v738 = vpop.f32.mrb[0].mxu0
      %v739 = vadd.f32 0.0, %v738
      %v740 = vpop.f32.mrb[0].mxu0
      %741 = vmatprep.mubr.bf16.mxu0 0
      %742 = vmatmul.mubr.bf16.gmra.mrb[0].mxu0 %v489
      %v743 = vpop.f32.mrb[0].mxu0
      %v744 = vadd.f32 0.0, %v743
      %v745 = vpop.f32.mrb[0].mxu0
      %v746 = vpop.f32.mrb[0].mxu0
      %v747 = vadd.f32 0.0, %v746
      %v748 = vpop.f32.mrb[0].mxu0
      %749 = vmatprep.mubr.bf16.mxu0 0
      %750 = vmatmul.mubr.bf16.gmra.mrb[0].mxu0 %v492
      %v751 = vpop.f32.mrb[0].mxu0
      %v752 = vadd.f32 0.0, %v751
      %v753 = vpop.f32.mrb[0].mxu0
      %v754 = vpop.f32.mrb[0].mxu0
      %v755 = vadd.f32 0.0, %v754
      %v756 = vpop.f32.mrb[0].mxu0
      %757 = vmatprep.mubr.bf16.mxu0 0
      %758 = vmatmul.mubr.bf16.gmra.mrb[0].mxu0 %v495
      %v759 = vpop.f32.mrb[0].mxu0
      %v760 = vadd.f32 0.0, %v759
      %v761 = vpop.f32.mrb[0].mxu0
      %v762 = vpop.f32.mrb[0].mxu0
      %v763 = vadd.f32 0.0, %v762
      %v764 = vpop.f32.mrb[0].mxu0
      %765 = vmatprep.mubr.bf16.mxu0 0
      %766 = vmatmul.mubr.bf16.gmra.mrb[0].mxu0 %v498
      %v767 = vpop.f32.mrb[0].mxu0
      %v768 = vadd.f32 0.0, %v767
      %v769 = vpop.f32.mrb[0].mxu0
      %v770 = vpop.f32.mrb[0].mxu0
      %v771 = vadd.f32 0.0, %v770
      %v772 = vpop.f32.mrb[0].mxu0
      %773 = vmatprep.mubr.bf16.mxu0 0
      %774 = vmatmul.mubr.bf16.gmra.mrb[0].mxu0 %v501
      %v775 = vpop.f32.mrb[0].mxu0
      %v776 = vadd.f32 0.0, %v775
      %v777 = vpop.f32.mrb[0].mxu0
      %v778 = vpop.f32.mrb[0].mxu0
      %v779 = vadd.f32 0.0, %v778
      %v780 = vpop.f32.mrb[0].mxu0
      %781 = vmatprep.mubr.bf16.mxu0 0
      %782 = vmatmul.mubr.bf16.gmra.mrb[0].mxu0 %v504
      %v783 = vpop.f32.mrb[0].mxu0
      %v784 = vadd.f32 0.0, %v783
      %v785 = vpop.f32.mrb[0].mxu0
      %v786 = vpop.f32.mrb[0].mxu0
      %v787 = vadd.f32 0.0, %v786
      %v788 = vpop.f32.mrb[0].mxu0
      %789 = vmatprep.mubr.bf16.mxu0 0
      %790 = vmatmul.mubr.bf16.gmra.mrb[0].mxu0 %v507
      %v791 = vpop.f32.mrb[0].mxu0
      %v792 = vadd.f32 0.0, %v791
      %v793 = vpop.f32.mrb[0].mxu0
      %v794 = vpop.f32.mrb[0].mxu0
      %v795 = vadd.f32 0.0, %v794
      %v796 = vpop.f32.mrb[0].mxu0
      %797 = vdwg.mxu0
      %v798 = vmax.f32 %v544, 0.0
      %v799 = vmax.f32 %v547, 0.0
      %v800 = vmax.f32 %v552, 0.0
      %v801 = vmax.f32 %v555, 0.0
      %v802 = vmax.f32 %v560, 0.0
      %v803 = vmax.f32 %v563, 0.0
      %v804 = vmax.f32 %v568, 0.0
      %v805 = vmax.f32 %v571, 0.0
      %v806 = vmax.f32 %v576, 0.0
      %v807 = vmax.f32 %v579, 0.0
      %v808 = vmax.f32 %v584, 0.0
      %v809 = vmax.f32 %v587, 0.0
      %v810 = vmax.f32 %v592, 0.0
      %v811 = vmax.f32 %v595, 0.0
      %v812 = vmax.f32 %v600, 0.0
      %v813 = vmax.f32 %v603, 0.0
      %v814 = vmax.f32 %v608, 0.0
      %v815 = vmax.f32 %v611, 0.0
      %v816 = vmax.f32 %v616, 0.0
      %v817 = vmax.f32 %v619, 0.0
      %v818 = vmax.f32 %v624, 0.0
      %v819 = vmax.f32 %v627, 0.0
      %v820 = vmax.f32 %v632, 0.0
      %v821 = vmax.f32 %v635, 0.0
      %v822 = vmax.f32 %v640, 0.0
      %v823 = vmax.f32 %v643, 0.0
      %v824 = vmax.f32 %v648, 0.0
      %v825 = vmax.f32 %v651, 0.0
      %v826 = vmax.f32 %v656, 0.0
      %v827 = vmax.f32 %v659, 0.0
      %v828 = vmax.f32 %v664, 0.0
      %v829 = vmax.f32 %v667, 0.0
      %v830 = vmax.f32 %v672, 0.0
      %v831 = vmax.f32 %v675, 0.0
      %v832 = vmax.f32 %v680, 0.0
      %v833 = vmax.f32 %v683, 0.0
      %v834 = vmax.f32 %v688, 0.0
      %v835 = vmax.f32 %v691, 0.0
      %v836 = vmax.f32 %v696, 0.0
      %v837 = vmax.f32 %v699, 0.0
      %v838 = vmax.f32 %v704, 0.0
      %v839 = vmax.f32 %v707, 0.0
      %v840 = vmax.f32 %v712, 0.0
      %v841 = vmax.f32 %v715, 0.0
      %v842 = vmax.f32 %v720, 0.0
      %v843 = vmax.f32 %v723, 0.0
      %v844 = vmax.f32 %v728, 0.0
      %v845 = vmax.f32 %v731, 0.0
      %v846 = vmax.f32 %v736, 0.0
      %v847 = vmax.f32 %v739, 0.0
      %v848 = vmax.f32 %v744, 0.0
      %v849 = vmax.f32 %v747, 0.0
      %v850 = vmax.f32 %v752, 0.0
      %v851 = vmax.f32 %v755, 0.0
      %v852 = vmax.f32 %v760, 0.0
      %v853 = vmax.f32 %v763, 0.0
      %v854 = vmax.f32 %v768, 0.0
      %v855 = vmax.f32 %v771, 0.0
      %v856 = vmax.f32 %v776, 0.0
      %v857 = vmax.f32 %v779, 0.0
      %v858 = vmax.f32 %v784, 0.0
      %v859 = vmax.f32 %v787, 0.0
      %v860 = vmax.f32 %v792, 0.0
      %v861 = vmax.f32 %v795, 0.0
      %v862 = vmin.f32 %v798, 6.0
      %v863 = vmin.f32 %v799, 6.0
      %v864 = vmin.f32 %v800, 6.0
      %v865 = vmin.f32 %v801, 6.0
      %v866 = vmin.f32 %v802, 6.0
      %v867 = vmin.f32 %v803, 6.0
      %v868 = vmin.f32 %v804, 6.0
      %v869 = vmin.f32 %v805, 6.0
      %v870 = vmin.f32 %v806, 6.0
      %v871 = vmin.f32 %v807, 6.0
      %v872 = vmin.f32 %v808, 6.0
      %v873 = vmin.f32 %v809, 6.0
      %v874 = vmin.f32 %v810, 6.0
      %v875 = vmin.f32 %v811, 6.0
      %v876 = vmin.f32 %v812, 6.0
      %v877 = vmin.f32 %v813, 6.0
      %v878 = vmin.f32 %v814, 6.0
      %v879 = vmin.f32 %v815, 6.0
      %v880 = vmin.f32 %v816, 6.0
      %v881 = vmin.f32 %v817, 6.0
      %v882 = vmin.f32 %v818, 6.0
      %v883 = vmin.f32 %v819, 6.0
      %v884 = vmin.f32 %v820, 6.0
      %v885 = vmin.f32 %v821, 6.0
      %v886 = vmin.f32 %v822, 6.0
      %v887 = vmin.f32 %v823, 6.0
      %v888 = vmin.f32 %v824, 6.0
      %v889 = vmin.f32 %v825, 6.0
      %v890 = vmin.f32 %v826, 6.0
      %v891 = vmin.f32 %v827, 6.0
      %v892 = vmin.f32 %v828, 6.0
      %v893 = vmin.f32 %v829, 6.0
      %v894 = vmin.f32 %v830, 6.0
      %v895 = vmin.f32 %v831, 6.0
      %v896 = vmin.f32 %v832, 6.0
      %v897 = vmin.f32 %v833, 6.0
      %v898 = vmin.f32 %v834, 6.0
      %v899 = vmin.f32 %v835, 6.0
      %v900 = vmin.f32 %v836, 6.0
      %v901 = vmin.f32 %v837, 6.0
      %v902 = vmin.f32 %v838, 6.0
      %v903 = vmin.f32 %v839, 6.0
      %v904 = vmin.f32 %v840, 6.0
      %v905 = vmin.f32 %v841, 6.0
      %v906 = vmin.f32 %v842, 6.0
      %v907 = vmin.f32 %v843, 6.0
      %v908 = vmin.f32 %v844, 6.0
      %v909 = vmin.f32 %v845, 6.0
      %v910 = vmin.f32 %v846, 6.0
      %v911 = vmin.f32 %v847, 6.0
      %v912 = vmin.f32 %v848, 6.0
      %v913 = vmin.f32 %v849, 6.0
      %v914 = vmin.f32 %v850, 6.0
      %v915 = vmin.f32 %v851, 6.0
      %v916 = vmin.f32 %v852, 6.0
      %v917 = vmin.f32 %v853, 6.0
      %v918 = vmin.f32 %v854, 6.0
      %v919 = vmin.f32 %v855, 6.0
      %v920 = vmin.f32 %v856, 6.0
      %v921 = vmin.f32 %v857, 6.0
      %v922 = vmin.f32 %v858, 6.0
      %v923 = vmin.f32 %v859, 6.0
      %v924 = vmin.f32 %v860, 6.0
      %v925 = vmin.f32 %v861, 6.0
      %v926 = vadd.f32 %v862, %v863
      %v927 = vadd.f32 %v926, %v864
      %v928 = vadd.f32 %v927, %v865
      %v929 = vadd.f32 %v928, %v866
      %v930 = vadd.f32 %v929, %v867
      %v931 = vadd.f32 %v930, %v868
      %v932 = vadd.f32 %v931, %v869
      %v933 = vrot.slane %v932, 4
      %v934 = vadd.f32 %v932, %v933
      %v935 = vrot.slane %v934, 2
      %v936 = vadd.f32 %v934, %v935
      %v937 = vrot.slane %v936, 1
      %v938 = vadd.f32 %v936, %v937
      %v939 = vadd.f32 %v870, %v871
      %v940 = vadd.f32 %v939, %v872
      %v941 = vadd.f32 %v940, %v873
      %v942 = vadd.f32 %v941, %v874
      %v943 = vadd.f32 %v942, %v875
      %v944 = vadd.f32 %v943, %v876
      %v945 = vadd.f32 %v944, %v877
      %v946 = vrot.slane %v945, 4
      %v947 = vadd.f32 %v945, %v946
      %v948 = vrot.slane %v947, 2
      %v949 = vadd.f32 %v947, %v948
      %v950 = vrot.slane %v949, 1
      %v951 = vadd.f32 %v949, %v950
      %v952 = vadd.f32 %v878, %v879
      %v953 = vadd.f32 %v952, %v880
      %v954 = vadd.f32 %v953, %v881
      %v955 = vadd.f32 %v954, %v882
      %v956 = vadd.f32 %v955, %v883
      %v957 = vadd.f32 %v956, %v884
      %v958 = vadd.f32 %v957, %v885
      %v959 = vrot.slane %v958, 4
      %v960 = vadd.f32 %v958, %v959
      %v961 = vrot.slane %v960, 2
      %v962 = vadd.f32 %v960, %v961
      %v963 = vrot.slane %v962, 1
      %v964 = vadd.f32 %v962, %v963
      %v965 = vadd.f32 %v886, %v887
      %v966 = vadd.f32 %v965, %v888
      %v967 = vadd.f32 %v966, %v889
      %v968 = vadd.f32 %v967, %v890
      %v969 = vadd.f32 %v968, %v891
      %v970 = vadd.f32 %v969, %v892
      %v971 = vadd.f32 %v970, %v893
      %v972 = vrot.slane %v971, 4
      %v973 = vadd.f32 %v971, %v972
      %v974 = vrot.slane %v973, 2
      %v975 = vadd.f32 %v973, %v974
      %v976 = vrot.slane %v975, 1
      %v977 = vadd.f32 %v975, %v976
      %v978 = vadd.f32 %v894, %v895
      %v979 = vadd.f32 %v978, %v896
      %v980 = vadd.f32 %v979, %v897
      %v981 = vadd.f32 %v980, %v898
      %v982 = vadd.f32 %v981, %v899
      %v983 = vadd.f32 %v982, %v900
      %v984 = vadd.f32 %v983, %v901
      %v985 = vrot.slane %v984, 4
      %v986 = vadd.f32 %v984, %v985
      %v987 = vrot.slane %v986, 2
      %v988 = vadd.f32 %v986, %v987
      %v989 = vrot.slane %v988, 1
      %v990 = vadd.f32 %v988, %v989
      %v991 = vadd.f32 %v902, %v903
      %v992 = vadd.f32 %v991, %v904
      %v993 = vadd.f32 %v992, %v905
      %v994 = vadd.f32 %v993, %v906
      %v995 = vadd.f32 %v994, %v907
      %v996 = vadd.f32 %v995, %v908
      %v997 = vadd.f32 %v996, %v909
      %v998 = vrot.slane %v997, 4
      %v999 = vadd.f32 %v997, %v998
      %v1000 = vrot.slane %v999, 2
      %v1001 = vadd.f32 %v999, %v1000
      %v1002 = vrot.slane %v1001, 1
      %v1003 = vadd.f32 %v1001, %v1002
      %v1004 = vadd.f32 %v910, %v911
      %v1005 = vadd.f32 %v1004, %v912
      %v1006 = vadd.f32 %v1005, %v913
      %v1007 = vadd.f32 %v1006, %v914
      %v1008 = vadd.f32 %v1007, %v915
      %v1009 = vadd.f32 %v1008, %v916
      %v1010 = vadd.f32 %v1009, %v917
      %v1011 = vrot.slane %v1010, 4
      %v1012 = vadd.f32 %v1010, %v1011
      %v1013 = vrot.slane %v1012, 2
      %v1014 = vadd.f32 %v1012, %v1013
      %v1015 = vrot.slane %v1014, 1
      %v1016 = vadd.f32 %v1014, %v1015
      %v1017 = vadd.f32 %v918, %v919
      %v1018 = vadd.f32 %v1017, %v920
      %v1019 = vadd.f32 %v1018, %v921
      %v1020 = vadd.f32 %v1019, %v922
      %v1021 = vadd.f32 %v1020, %v923
      %v1022 = vadd.f32 %v1021, %v924
      %v1023 = vadd.f32 %v1022, %v925
      %v1024 = vrot.slane %v1023, 4
      %v1025 = vadd.f32 %v1023, %v1024
      %v1026 = vrot.slane %v1025, 2
      %v1027 = vadd.f32 %v1025, %v1026
      %v1028 = vrot.slane %v1027, 1
      %v1029 = vadd.f32 %v1027, %v1028
      %v1030 = vrcp.pop 64.0
      %v1031 = vmul.f32 %v938, %v1030
      %v1032 = vmul.f32 %v951, %v1030
      %v1033 = vmul.f32 %v964, %v1030
      %v1034 = vmul.f32 %v977, %v1030
      %v1035 = vmul.f32 %v990, %v1030
      %v1036 = vmul.f32 %v1003, %v1030
      %v1037 = vmul.f32 %v1016, %v1030
      %v1038 = vmul.f32 %v1029, %v1030
      %v1039 = vld [vmem:[%s2] sm:$0xff]
      %v1040 = vld [vmem:[%s2 + $0x8] sm:$0xff]
      %v1041 = vld [vmem:[%s2 + $0x10] sm:$0xff]
      %v1042 = vld [vmem:[%s2 + $0x18] sm:$0xff]
      %v1043 = vld [vmem:[%s2 + $0x20] sm:$0xff]
      %v1044 = vld [vmem:[%s2 + $0x28] sm:$0xff]
      %v1045 = vld [vmem:[%s2 + $0x30] sm:$0xff]
      %v1046 = vld [vmem:[%s2 + $0x38] sm:$0xff]
      %v1047 = vld [vmem:[%s2 + $0x40] sm:$0xff]
      %v1048 = vld [vmem:[%s2 + $0x48] sm:$0xff]
      %v1049 = vld [vmem:[%s2 + $0x50] sm:$0xff]
      %v1050 = vld [vmem:[%s2 + $0x58] sm:$0xff]
      %v1051 = vld [vmem:[%s2 + $0x60] sm:$0xff]
      %v1052 = vld [vmem:[%s2 + $0x68] sm:$0xff]
      %v1053 = vld [vmem:[%s2 + $0x70] sm:$0xff]
      %v1054 = vld [vmem:[%s2 + $0x78] sm:$0xff]
      %vm1063 = vcmask 1041409
      %v1064 = vsel %vm1063, %v1032, %v1031
      %vm1065 = vcmask 1042434
      %v1066 = vsel %vm1065, %v1033, %v1064
      %vm1067 = vcmask 1043459
      %v1068 = vsel %vm1067, %v1034, %v1066
      %vm1069 = vcmask 1044484
      %v1070 = vsel %vm1069, %v1035, %v1068
      %vm1071 = vcmask 1045509
      %v1072 = vsel %vm1071, %v1036, %v1070
      %vm1073 = vcmask 1046534
      %v1074 = vsel %vm1073, %v1037, %v1072
      %vm1075 = vcmask 1047559
      %v1076 = vsel %vm1075, %v1038, %v1074
      %1078 = vmatprep.subr.mxu0 0.0
      %1079 = vmatpush1.msra.mxu0 %v1039
      %1080 = vmatprep.subr.mxu0 0.0
      %1081 = vmatpush1.msra.mxu0 %v1040
      %1082 = vmatprep.subr.mxu0 0.0
      %1083 = vmatpush1.msra.mxu0 %v1041
      %1084 = vmatprep.subr.mxu0 0.0
      %1085 = vmatpush1.msra.mxu0 %v1042
      %1086 = vmatprep.subr.mxu0 0.0
      %1087 = vmatpush1.msra.mxu0 %v1043
      %1088 = vmatprep.subr.mxu0 0.0
      %1089 = vmatpush1.msra.mxu0 %v1044
      %1090 = vmatprep.subr.mxu0 0.0
      %1091 = vmatpush1.msra.mxu0 %v1045
      %1092 = vmatprep.subr.mxu0 0.0
      %1093 = vmatpush1.msra.mxu0 %v1046
      %1094 = vmatprep.subr.mxu0 0.0
      %1095 = vmatpush1.msra.mxu0 %v1047
      %1096 = vmatprep.subr.mxu0 0.0
      %1097 = vmatpush1.msra.mxu0 %v1048
      %1098 = vmatprep.subr.mxu0 0.0
      %1099 = vmatpush1.msra.mxu0 %v1049
      %1100 = vmatprep.subr.mxu0 0.0
      %1101 = vmatpush1.msra.mxu0 %v1050
      %1102 = vmatprep.subr.mxu0 0.0
      %1103 = vmatpush1.msra.mxu0 %v1051
      %1104 = vmatprep.subr.mxu0 0.0
      %1105 = vmatpush1.msra.mxu0 %v1052
      %1106 = vmatprep.subr.mxu0 0.0
      %1107 = vmatpush1.msra.mxu0 %v1053
      %1108 = vmatprep.subr.mxu0 0.0
      %1109 = vmatpush1.msra.mxu0 %v1054
      %1110 = vmatprep.subr.mxu0 0.0
      %1111 = vmatpush1.msra.mxu0 0.0
      %1112 = vmatprep.subr.mxu0 0.0
      %1113 = vmatpush1.msra.mxu0 0.0
      %1114 = vmatprep.subr.mxu0 0.0
      %1115 = vmatpush1.msra.mxu0 0.0
      %1116 = vmatprep.subr.mxu0 0.0
      %1117 = vmatpush1.msra.mxu0 0.0
      %1118 = vmatprep.subr.mxu0 0.0
      %1119 = vmatpush1.msra.mxu0 0.0
      %1120 = vmatprep.subr.mxu0 0.0
      %1121 = vmatpush1.msra.mxu0 0.0
      %1122 = vmatprep.subr.mxu0 0.0
      %1123 = vmatpush1.msra.mxu0 0.0
      %1124 = vmatprep.subr.mxu0 0.0
      %1125 = vmatpush1.msra.mxu0 0.0
      %1126 = vmatprep.subr.mxu0 0.0
      %1127 = vmatpush1.msra.mxu0 0.0
      %1128 = vmatprep.subr.mxu0 0.0
      %1129 = vmatpush1.msra.mxu0 0.0
      %1130 = vmatprep.subr.mxu0 0.0
      %1131 = vmatpush1.msra.mxu0 0.0
      %1132 = vmatprep.subr.mxu0 0.0
      %1133 = vmatpush1.msra.mxu0 0.0
      %1134 = vmatprep.subr.mxu0 0.0
      %1135 = vmatpush1.msra.mxu0 0.0
      %1136 = vmatprep.subr.mxu0 0.0
      %1137 = vmatpush1.msra.mxu0 0.0
      %1138 = vmatprep.subr.mxu0 0.0
      %1139 = vmatpush1.msra.mxu0 0.0
      %1140 = vmatprep.subr.mxu0 0.0
      %1141 = vmatpush1.msra.mxu0 0.0
      %1142 = vmatprep.mubr.f32.mxu0 0.0
      %1143 = vmatmul.mubr.f32.gmra.mrb[0].mxu0 %v1076
      %v1144 = vpop.f32.mrb[0].mxu0
      %v1145 = vadd.f32 0.0, %v1144
      %v1146 = vpop.f32.mrb[0].mxu0
      %1147 = vdwg.mxu0
      %1148 = vst [vmem:[%s170] sm:$0xff] %v1145
      %p1149 = scmp.lt.s32.totalorder %s14, 1
      %s1150 = scalar_select %p1149, %s14, 1
      %s1151 = smul.addr %s1150, 8
      %s1152 = scalar_lea.vmem %s3, %s1151
      // Predicated region
      $region33: #{ast_t_backbone_pred.1} parent=31 // pred_check
        %p1153 = pneg %p100
      $region34: #{ast_t_backbone_pred.1} parent=31 // pred_check_branch
        %1155 = sbr.rel (%p1153) target = $region36
      $region35: #{ast_t_backbone_pred.1} parent=31 // pred_region
        _
      $region36: #{ast_t_backbone_pred.1} parent=31 // pred_fallthru
        _
    $region32: #{ast_t_backbone_pred.1} parent=5 // pred_fallthru
      _
    %p1156 = scmp.le.s32.totalorder 2, %s9
    // Predicated region
    $region37: #{ast_t_backbone_pred.1} parent=5 // pred_check
      %p1157 = pneg %p1156
    $region38: #{ast_t_backbone_pred.1} parent=5 // pred_check_branch
      %1159 = sbr.rel (%p1157) target = $region40
    $region39: #{ast_t_backbone_pred.1} parent=5 // pred_region
      %s1160 = ssub.s32 %s9, 2
      // Predicated region
      $region41: #{ast_t_backbone_pred.1} parent=39 // pred_check
        %p1161 = pneg %p106
      $region42: #{ast_t_backbone_pred.1} parent=39 // pred_check_branch
        %1163 = sbr.rel (%p1161) target = $region44
      $region43: #{ast_t_backbone_pred.1} parent=39 // pred_region
        %p1164 = scmp.lt.s32.totalorder %s15, 1
        %s1165 = scalar_select %p1164, %s15, 1
        %s1166 = smul.addr %s1165, 8
        %s1167 = scalar_lea.vmem %s3, %s1166
      $region44: #{ast_t_backbone_pred.1} parent=39 // pred_fallthru
        _
    $region40: #{ast_t_backbone_pred.1} parent=5 // pred_fallthru
      _
  $region6: #{ast_t_backbone_pred.1} parent=0 // loop_footer
    %s13 = sadd.s32 1, %s9
  $region7: #{ast_t_backbone_pred.1} parent=0 // loop_footer_branch
    %8 = sbr.rel target = $region3
  $region8: #{ast_t_backbone_pred.1} parent=0 // loop_exit
    _

</llo_original>
